<compile_context>
chip_gen: v7x
topology: tpu7x:2x2x1
jax: 0.10.0
libtpu: 0.0.40
codegen_flags: <defaults>
</compile_context>

<pallas_src>
import jax
import jax.numpy as jnp
from jax.experimental import pallas as pl
from jax.experimental.pallas import tpu as pltpu


def _round_up(x, m):
    return ((x + m - 1) // m) * m


def qvalue_kernel(cat_ref, w1_ref, b1_ref, w2_ref, b2_ref, w3_ref, b3_ref,
                  out_ref):
    """Fused 3-layer MLP.  Matmul operands are in the weight dtype (f32 or
    bf16); accumulation, bias add and ReLU are always f32."""
    h1 = jnp.dot(cat_ref[...], w1_ref[...],
                 preferred_element_type=jnp.float32) + b1_ref[...]
    h1 = jnp.maximum(h1, 0.0)

    h2 = jnp.dot(h1.astype(w2_ref.dtype), w2_ref[...],
                 preferred_element_type=jnp.float32) + b2_ref[...]
    h2 = jnp.maximum(h2, 0.0)

    out = jnp.dot(h2.astype(w3_ref.dtype), w3_ref[...],
                  preferred_element_type=jnp.float32) + b3_ref[...]
    out_ref[...] = out.astype(out_ref.dtype)  # narrow (TB, action_dim) store


def qvalue_forward(x, a, params, *, block_b=1024):
    """Forward pass. x: (B, state_dim), a: (B, action_dim) -> (B, action_dim)."""
    w1, b1, w2, b2, w3, b3 = params
    cat_dim, hidden_dim = w1.shape
    action_dim = w3.shape[1]
    wdt = w1.dtype

    B = x.shape[0]

    # Fuse the concat in the wrapper (64 B / row) and pre-cast to the weight
    # dtype so the bf16 path streams bf16 inputs into the kernel.
    cat = jnp.concatenate([x, a], axis=1).astype(wdt)

    # Batch tiling: sublane-aligned, and split into >= 2 tiles whenever the
    # batch spans more than one sublane group so both v7x TensorCores get work.
    Bp8 = _round_up(B, 8)
    if Bp8 > 8:
        TB = min(block_b, _round_up(pl.cdiv(Bp8, 2), 8))
    else:
        TB = Bp8
    Bp = _round_up(Bp8, TB)                  # padded batch (remainder handling)
    if Bp != B:
        cat = jnp.pad(cat, ((0, Bp - B), (0, 0)))

    grid = (Bp // TB,)
    batch_map = lambda i: (i, 0)
    const_map = lambda i: (0, 0)             # weights resident across grid steps

    out = pl.pallas_call(
        qvalue_kernel,
        out_shape=jax.ShapeDtypeStruct((Bp, action_dim), jnp.float32),
        grid=grid,
        in_specs=[
            pl.BlockSpec((TB, cat_dim), batch_map),              # x|a concat
            pl.BlockSpec((cat_dim, hidden_dim), const_map),      # w1
            pl.BlockSpec((1, hidden_dim), const_map),            # b1
            pl.BlockSpec((hidden_dim, hidden_dim), const_map),   # w2
            pl.BlockSpec((1, hidden_dim), const_map),            # b2
            pl.BlockSpec((hidden_dim, action_dim), const_map),   # w3
            pl.BlockSpec((1, action_dim), const_map),            # b3
        ],
        out_specs=pl.BlockSpec((TB, action_dim), batch_map),
        compiler_params=pltpu.CompilerParams(
            dimension_semantics=("parallel",)),  # shards batch across v7x TCs
    )(cat, w1, b1, w2, b2, w3, b3)

    return out[:B]


def init_params(key, state_dim, hidden_dim, action_dim, param_dtype=jnp.float32):
    """PyTorch-style init U(-1/sqrt(fan_in), 1/sqrt(fan_in)).

    Layout for the kernel:
      * w1 stays a single (state_dim + action_dim, H) matrix — the concat is
        done on the (tiny) input wrapper-side, so layer 1 is one K=16 matmul.
      * fc_out weight/bias keep their natural (H, action_dim) shape; the
        kernel stores a narrow (TB, action_dim) output block.
      * Weights are cast to `param_dtype` (f32 or bf16); biases stay f32 since
        bias add / ReLU run on the f32 accumulator (required on v5e).
    """
    def linear(key, fan_in, fan_out):
        kw, kb = jax.random.split(key)
        bound = 1.0 / jnp.sqrt(jnp.float32(fan_in))
        w = jax.random.uniform(kw, (fan_in, fan_out), jnp.float32, -bound, bound)
        b = jax.random.uniform(kb, (1, fan_out), jnp.float32, -bound, bound)
        return w, b

    k1, k2, k3 = jax.random.split(key, 3)
    w1, b1 = linear(k1, state_dim + action_dim, hidden_dim)
    w2, b2 = linear(k2, hidden_dim, hidden_dim)
    w3, b3 = linear(k3, hidden_dim, action_dim)

    w1 = w1.astype(param_dtype)
    w2 = w2.astype(param_dtype)
    w3 = w3.astype(param_dtype)
    return (w1, b1, w2, b2, w3, b3)


def reference_forward(x, a, params):
    """Pure-JAX reference matching the PyTorch module (f32 math)."""
    w1, b1, w2, b2, w3, b3 = params
    cat = jnp.concatenate([x, a], axis=1)
    h1 = jnp.maximum(cat @ w1.astype(jnp.float32) + b1, 0.0)
    h2 = jnp.maximum(h1 @ w2.astype(jnp.float32) + b2, 0.0)
    return h2 @ w3.astype(jnp.float32) + b3


if __name__ == "__main__":
    # Small shapes consistent with the module: batch=4, state_dim=12,
    # action_dim=4, hidden_dim=32.
    B, STATE_DIM, HIDDEN_DIM, ACTION_DIM = 4, 12, 32, 4

    root = jax.random.PRNGKey(0)
    kx, ka, kp, kx2, ka2 = jax.random.split(root, 5)

    x = jax.random.normal(kx, (B, STATE_DIM), jnp.float32)
    a = jax.random.normal(ka, (B, ACTION_DIM), jnp.float32)

    # f32 weights: exact-ish match to the PyTorch-style reference.
    params_f32 = init_params(kp, STATE_DIM, HIDDEN_DIM, ACTION_DIM, jnp.float32)
    out = jax.block_until_ready(qvalue_forward(x, a, params_f32))
    ref = reference_forward(x, a, params_f32)
    assert out.shape == (B, ACTION_DIM)
    assert jnp.allclose(out, ref, atol=1e-5, rtol=1e-5)

    # Larger, non-aligned batch exercises the multi-tile grid + padding path
    # (also the v7x two-TensorCore split).
    B2 = 300
    x2 = jax.random.normal(kx2, (B2, STATE_DIM), jnp.float32)
    a2 = jax.random.normal(ka2, (B2, ACTION_DIM), jnp.float32)
    out2 = jax.block_until_ready(qvalue_forward(x2, a2, params_f32))
    ref2 = reference_forward(x2, a2, params_f32)
    assert out2.shape == (B2, ACTION_DIM)
    assert jnp.allclose(out2, ref2, atol=1e-5, rtol=1e-5)

    # bf16 weights + bf16 streamed inputs / f32 accumulation (fast path on all
    # generations): looser tolerance since activations are quantized to bf16
    # between layers relative to the f32 reference.
    params_bf16 = init_params(kp, STATE_DIM, HIDDEN_DIM, ACTION_DIM, jnp.bfloat16)
    out_bf16 = jax.block_until_ready(qvalue_forward(x, a, params_bf16))
    ref_bf16 = reference_forward(x, a, params_bf16)
    assert out_bf16.shape == (B, ACTION_DIM)
    assert jnp.allclose(out_bf16, ref_bf16, atol=2e-2, rtol=2e-2)

    print("KERNEL_OK")
</pallas_src>

<mosaic_0001>
module attributes {stable_mosaic.version = 11 : i64} {
  func.func @qvalue_kernel(%arg0: i32, %arg1: memref<8x16xf32, #tpu.memory_space<vmem>>, %arg2: memref<16x32xf32, #tpu.memory_space<vmem>>, %arg3: memref<1x32xf32, #tpu.memory_space<vmem>>, %arg4: memref<32x32xf32, #tpu.memory_space<vmem>>, %arg5: memref<1x32xf32, #tpu.memory_space<vmem>>, %arg6: memref<32x4xf32, #tpu.memory_space<vmem>>, %arg7: memref<1x4xf32, #tpu.memory_space<vmem>>, %arg8: memref<8x4xf32, #tpu.memory_space<vmem>>) attributes {dimension_semantics = [#tpu.dimension_semantics<parallel>], iteration_bounds = array<i64: 1>, scalar_prefetch = 0 : i64, scratch_operands = 0 : i64, tpu.core_type = #tpu.core_type<tc>, window_params = [{transform_indices = @transform_0, window_bounds = array<i64: 8, 16>}, {pipeline_mode = #tpu.pipeline_mode<synchronous>, transform_indices = @transform_1, window_bounds = array<i64: 16, 32>}, {pipeline_mode = #tpu.pipeline_mode<synchronous>, transform_indices = @transform_2, window_bounds = array<i64: 1, 32>}, {pipeline_mode = #tpu.pipeline_mode<synchronous>, transform_indices = @transform_3, window_bounds = array<i64: 32, 32>}, {pipeline_mode = #tpu.pipeline_mode<synchronous>, transform_indices = @transform_4, window_bounds = array<i64: 1, 32>}, {pipeline_mode = #tpu.pipeline_mode<synchronous>, transform_indices = @transform_5, window_bounds = array<i64: 32, 4>}, {pipeline_mode = #tpu.pipeline_mode<synchronous>, transform_indices = @transform_6, window_bounds = array<i64: 1, 4>}, {transform_indices = @transform_7, window_bounds = array<i64: 8, 4>}]} {
    %c0 = arith.constant 0 : index
    %c0_0 = arith.constant 0 : index
    %0 = vector.load %arg1[%c0, %c0_0] : memref<8x16xf32, #tpu.memory_space<vmem>>, vector<8x16xf32>
    %c0_1 = arith.constant 0 : index
    %c0_2 = arith.constant 0 : index
    %1 = vector.load %arg2[%c0_1, %c0_2] : memref<16x32xf32, #tpu.memory_space<vmem>>, vector<16x32xf32>
    %cst = arith.constant dense<0.000000e+00> : vector<8x32xf32>
    %2 = tpu.matmul %0, %1, %cst {dimension_numbers = #tpu.dot_dimension_numbers<[1], [0], [0], [1], [0, 0, 1, 1], [], []>} : vector<8x16xf32>, vector<16x32xf32>, vector<8x32xf32> -> vector<8x32xf32>
    %c0_3 = arith.constant 0 : index
    %c0_4 = arith.constant 0 : index
    %3 = vector.load %arg3[%c0_3, %c0_4] : memref<1x32xf32, #tpu.memory_space<vmem>>, vector<1x32xf32>
    %4 = vector.broadcast %3 : vector<1x32xf32> to vector<8x32xf32>
    %5 = arith.addf %2, %4 : vector<8x32xf32>
    %cst_5 = arith.constant 0.000000e+00 : f32
    %6 = vector.broadcast %cst_5 : f32 to vector<8x32xf32>
    %7 = arith.maximumf %5, %6 : vector<8x32xf32>
    %c0_6 = arith.constant 0 : index
    %c0_7 = arith.constant 0 : index
    %8 = vector.load %arg4[%c0_6, %c0_7] : memref<32x32xf32, #tpu.memory_space<vmem>>, vector<32x32xf32>
    %cst_8 = arith.constant dense<0.000000e+00> : vector<8x32xf32>
    %9 = tpu.matmul %7, %8, %cst_8 {dimension_numbers = #tpu.dot_dimension_numbers<[1], [0], [0], [1], [0, 0, 1, 1], [], []>} : vector<8x32xf32>, vector<32x32xf32>, vector<8x32xf32> -> vector<8x32xf32>
    %c0_9 = arith.constant 0 : index
    %c0_10 = arith.constant 0 : index
    %10 = vector.load %arg5[%c0_9, %c0_10] : memref<1x32xf32, #tpu.memory_space<vmem>>, vector<1x32xf32>
    %11 = vector.broadcast %10 : vector<1x32xf32> to vector<8x32xf32>
    %12 = arith.addf %9, %11 : vector<8x32xf32>
    %cst_11 = arith.constant 0.000000e+00 : f32
    %13 = vector.broadcast %cst_11 : f32 to vector<8x32xf32>
    %14 = arith.maximumf %12, %13 : vector<8x32xf32>
    %c0_12 = arith.constant 0 : index
    %c0_13 = arith.constant 0 : index
    %15 = vector.load %arg6[%c0_12, %c0_13] : memref<32x4xf32, #tpu.memory_space<vmem>>, vector<32x4xf32>
    %cst_14 = arith.constant dense<0.000000e+00> : vector<8x4xf32>
    %16 = tpu.matmul %14, %15, %cst_14 {dimension_numbers = #tpu.dot_dimension_numbers<[1], [0], [0], [1], [0, 0, 1, 1], [], []>} : vector<8x32xf32>, vector<32x4xf32>, vector<8x4xf32> -> vector<8x4xf32>
    %c0_15 = arith.constant 0 : index
    %c0_16 = arith.constant 0 : index
    %17 = vector.load %arg7[%c0_15, %c0_16] : memref<1x4xf32, #tpu.memory_space<vmem>>, vector<1x4xf32>
    %18 = vector.broadcast %17 : vector<1x4xf32> to vector<8x4xf32>
    %19 = arith.addf %16, %18 : vector<8x4xf32>
    %c0_17 = arith.constant 0 : index
    %c0_18 = arith.constant 0 : index
    %20 = vector.load %arg8[%c0_17, %c0_18] : memref<8x4xf32, #tpu.memory_space<vmem>>, vector<8x4xf32>
    tpu.vector_store %arg8[%c0_17, %c0_18], %19 {strides = array<i32>} : memref<8x4xf32, #tpu.memory_space<vmem>>, vector<8x4xf32>,
    return
  }
  func.func @transform_0(%arg0: i32) -> (i32, i32) {
    %c0_i32 = arith.constant 0 : i32
    %c0_i32_0 = arith.constant 0 : i32
    return %arg0, %c0_i32 : i32, i32
  }
  func.func @transform_1(%arg0: i32) -> (i32, i32) {
    %c0_i32 = arith.constant 0 : i32
    %c0_i32_0 = arith.constant 0 : i32
    %c0_i32_1 = arith.constant 0 : i32
    return %c0_i32, %c0_i32_0 : i32, i32
  }
  func.func @transform_2(%arg0: i32) -> (i32, i32) {
    %c0_i32 = arith.constant 0 : i32
    %c0_i32_0 = arith.constant 0 : i32
    %c0_i32_1 = arith.constant 0 : i32
    return %c0_i32, %c0_i32_0 : i32, i32
  }
  func.func @transform_3(%arg0: i32) -> (i32, i32) {
    %c0_i32 = arith.constant 0 : i32
    %c0_i32_0 = arith.constant 0 : i32
    %c0_i32_1 = arith.constant 0 : i32
    return %c0_i32, %c0_i32_0 : i32, i32
  }
  func.func @transform_4(%arg0: i32) -> (i32, i32) {
    %c0_i32 = arith.constant 0 : i32
    %c0_i32_0 = arith.constant 0 : i32
    %c0_i32_1 = arith.constant 0 : i32
    return %c0_i32, %c0_i32_0 : i32, i32
  }
  func.func @transform_5(%arg0: i32) -> (i32, i32) {
    %c0_i32 = arith.constant 0 : i32
    %c0_i32_0 = arith.constant 0 : i32
    %c0_i32_1 = arith.constant 0 : i32
    return %c0_i32, %c0_i32_0 : i32, i32
  }
  func.func @transform_6(%arg0: i32) -> (i32, i32) {
    %c0_i32 = arith.constant 0 : i32
    %c0_i32_0 = arith.constant 0 : i32
    %c0_i32_1 = arith.constant 0 : i32
    return %c0_i32, %c0_i32_0 : i32, i32
  }
  func.func @transform_7(%arg0: i32) -> (i32, i32) {
    %c0_i32 = arith.constant 0 : i32
    %c0_i32_0 = arith.constant 0 : i32
    return %arg0, %c0_i32 : i32, i32
  }
}

</mosaic_0001>

<llo_original>
// kernel: tpu_custom_call.1
$region0: #{tpu_custom_call.1}
  #allocation0 [shape = 'u32[]', space=smem, size = 0x4, offset = 0x4, fixed_abs, tag = 'smem constant byte address 0x4 - core index']
  #allocation1 [shape = 'u32[144,128]{1,0:T(1,128)}', space=vmem, size = 0x12000, scoped, tag = 'internal scratch']
  %s0 = inlined_call_operand.vmem [shape: f32[8,16], index: 0, kind: input, shape index: {}]
  %s1 = inlined_call_operand.hbm [shape: f32[16,32], index: 1, kind: input, shape index: {}]
  %s2 = inlined_call_operand.vmem [shape: f32[1,32], index: 2, kind: input, shape index: {}]
  %s3 = inlined_call_operand.vmem [shape: f32[32,32], index: 3, kind: input, shape index: {}]
  %s4 = inlined_call_operand.vmem [shape: f32[1,32], index: 4, kind: input, shape index: {}]
  %s5 = inlined_call_operand.vmem [shape: f32[32,4], index: 5, kind: input, shape index: {}]
  %s6 = inlined_call_operand.vmem [shape: f32[1,4], index: 6, kind: input, shape index: {}]
  %s7 = inlined_call_operand.vmem [shape: f32[8,4], index: 7, kind: output, shape index: {}]
  %s8 = sld [smem:[#allocation0]]
  $region42: #{tpu_custom_call.1} parent=0
    _
  %s10 = ssub.s32 1, %s8
  %s11 = scalar_select 0, %s10, %s8
  $region1: #{tpu_custom_call.1} parent=0
    #allocation2 [shape = 'u8[8192]{0}', space=vmem, size = 0x2000, scoped, tag = 'input window, operand 1, single buffered']
    #allocation3 [shape = 's32[1]{0}', space=sflag, size = 0x4, scoped, tag = 'scoped memory for tpu_custom_call.1']
    %12 = vsyncpa [#allocation3], 0
    // Predicated region
    $region2: #{tpu_custom_call.1} parent=1 // pred_check
      _
    $region3: #{tpu_custom_call.1} parent=1 // pred_check_branch
      %14 = sbr.rel (0) target = $region5
    $region4: #{tpu_custom_call.1} parent=1 // pred_region
      _
    $region5: #{tpu_custom_call.1} parent=1 // pred_fallthru
      _
    // Predicated region
    $region6: #{tpu_custom_call.1} parent=1 // pred_check
      _
    $region7: #{tpu_custom_call.1} parent=1 // pred_check_branch
      %16 = sbr.rel (0) target = $region9
    $region8: #{tpu_custom_call.1} parent=1 // pred_region
      %s18 = ssub.s32 256, 256
      %19 = vsyncadd [#allocation3], %s18
      %s20 = sshll.u32 [#allocation2], 4
      %s21 = int_to_ptr.vmem [resolvable:$true] %s20
      %26 = dma.hbm_to_vmem [thread:$0]  %s1, 256, %s21, [#allocation3], 128, 128, 8
    $region9: #{tpu_custom_call.1} parent=1 // pred_fallthru
      _
    // Predicated region
    $region10: #{tpu_custom_call.1} parent=1 // pred_check
      _
    $region11: #{tpu_custom_call.1} parent=1 // pred_check_branch
      %28 = sbr.rel (0) target = $region13
    $region12: #{tpu_custom_call.1} parent=1 // pred_region
      _
    $region13: #{tpu_custom_call.1} parent=1 // pred_fallthru
      _
    // Predicated region
    $region14: #{tpu_custom_call.1} parent=1 // pred_check
      _
    $region15: #{tpu_custom_call.1} parent=1 // pred_check_branch
      %30 = sbr.rel (0) target = $region17
    $region16: #{tpu_custom_call.1} parent=1 // pred_region
      _
    $region17: #{tpu_custom_call.1} parent=1 // pred_fallthru
      _
    // Predicated region
    $region18: #{tpu_custom_call.1} parent=1 // pred_check
      _
    $region19: #{tpu_custom_call.1} parent=1 // pred_check_branch
      %32 = sbr.rel (0) target = $region21
    $region20: #{tpu_custom_call.1} parent=1 // pred_region
      _
    $region21: #{tpu_custom_call.1} parent=1 // pred_fallthru
      _
    // Predicated region
    $region22: #{tpu_custom_call.1} parent=1 // pred_check
      _
    $region23: #{tpu_custom_call.1} parent=1 // pred_check_branch
      %34 = sbr.rel (0) target = $region25
    $region24: #{tpu_custom_call.1} parent=1 // pred_region
      _
    $region25: #{tpu_custom_call.1} parent=1 // pred_fallthru
      _
    // Predicated region
    $region26: #{tpu_custom_call.1} parent=1 // pred_check
      _
    $region27: #{tpu_custom_call.1} parent=1 // pred_check_branch
      %36 = sbr.rel (0) target = $region29
    $region28: #{tpu_custom_call.1} parent=1 // pred_region
      _
    $region29: #{tpu_custom_call.1} parent=1 // pred_fallthru
      _
    // Predicated region
    $region30: #{tpu_custom_call.1} parent=1 // pred_check
      _
    $region31: #{tpu_custom_call.1} parent=1 // pred_check_branch
      %38 = sbr.rel (0) target = $region33
    $region32: #{tpu_custom_call.1} parent=1 // pred_region
      %39 = dma.done [#allocation3], 256
    $region33: #{tpu_custom_call.1} parent=1 // pred_fallthru
      _
    %v40 = vld [vmem:[%s0] sm:$0xff]
    %v41 = vld [vmem:[#allocation2] sm:$0xff]
    %v42 = vld [vmem:[#allocation2 + $0x8] sm:$0xff]
    %v43 = vld [vmem:[%s2] sm:$0x1]
    %v45 = vlaneseq
    %v46 = vshrl.u32 %v45, 7
    %v47 = vsub.s32 0, %v46
    %v48 = vrot.slane %v43, %v47
    %vm50 = vcmask 130048
    %v52 = vsel %vm50, %v40, 0
    %54 = vmatprep.subr.mxu0 0.0
    %55 = vmatpush1.msra.mxu0 %v41
    %56 = vmatprep.subr.mxu0 0.0
    %57 = vmatpush1.msra.mxu0 %v42
    %58 = vmatprep.subr.mxu0 0.0
    %59 = vmatpush1.msra.mxu0 0.0
    %60 = vmatprep.subr.mxu0 0.0
    %61 = vmatpush1.msra.mxu0 0.0
    %62 = vmatprep.subr.mxu0 0.0
    %63 = vmatpush1.msra.mxu0 0.0
    %64 = vmatprep.subr.mxu0 0.0
    %65 = vmatpush1.msra.mxu0 0.0
    %66 = vmatprep.subr.mxu0 0.0
    %67 = vmatpush1.msra.mxu0 0.0
    %68 = vmatprep.subr.mxu0 0.0
    %69 = vmatpush1.msra.mxu0 0.0
    %70 = vmatprep.subr.mxu0 0.0
    %71 = vmatpush1.msra.mxu0 0.0
    %72 = vmatprep.subr.mxu0 0.0
    %73 = vmatpush1.msra.mxu0 0.0
    %74 = vmatprep.subr.mxu0 0.0
    %75 = vmatpush1.msra.mxu0 0.0
    %76 = vmatprep.subr.mxu0 0.0
    %77 = vmatpush1.msra.mxu0 0.0
    %78 = vmatprep.subr.mxu0 0.0
    %79 = vmatpush1.msra.mxu0 0.0
    %80 = vmatprep.subr.mxu0 0.0
    %81 = vmatpush1.msra.mxu0 0.0
    %82 = vmatprep.subr.mxu0 0.0
    %83 = vmatpush1.msra.mxu0 0.0
    %84 = vmatprep.subr.mxu0 0.0
    %85 = vmatpush1.msra.mxu0 0.0
    %86 = vmatprep.subr.mxu0 0.0
    %87 = vmatpush1.msra.mxu0 0.0
    %88 = vmatprep.subr.mxu0 0.0
    %89 = vmatpush1.msra.mxu0 0.0
    %90 = vmatprep.subr.mxu0 0.0
    %91 = vmatpush1.msra.mxu0 0.0
    %92 = vmatprep.subr.mxu0 0.0
    %93 = vmatpush1.msra.mxu0 0.0
    %94 = vmatprep.subr.mxu0 0.0
    %95 = vmatpush1.msra.mxu0 0.0
    %96 = vmatprep.subr.mxu0 0.0
    %97 = vmatpush1.msra.mxu0 0.0
    %98 = vmatprep.subr.mxu0 0.0
    %99 = vmatpush1.msra.mxu0 0.0
    %100 = vmatprep.subr.mxu0 0.0
    %101 = vmatpush1.msra.mxu0 0.0
    %102 = vmatprep.subr.mxu0 0.0
    %103 = vmatpush1.msra.mxu0 0.0
    %104 = vmatprep.subr.mxu0 0.0
    %105 = vmatpush1.msra.mxu0 0.0
    %106 = vmatprep.subr.mxu0 0.0
    %107 = vmatpush1.msra.mxu0 0.0
    %108 = vmatprep.subr.mxu0 0.0
    %109 = vmatpush1.msra.mxu0 0.0
    %110 = vmatprep.subr.mxu0 0.0
    %111 = vmatpush1.msra.mxu0 0.0
    %112 = vmatprep.subr.mxu0 0.0
    %113 = vmatpush1.msra.mxu0 0.0
    %114 = vmatprep.subr.mxu0 0.0
    %115 = vmatpush1.msra.mxu0 0.0
    %116 = vmatprep.subr.mxu0 0.0
    %117 = vmatpush1.msra.mxu0 0.0
    %118 = vmatprep.mubr.f32.mxu0 0.0
    %119 = vmatmul.mubr.f32.gmra.mrb[0].mxu0 %v52
    %v120 = vpop.f32.mrb[0].mxu0
    %v121 = vadd.f32 %v48, %v120
    %v122 = vpop.f32.mrb[0].mxu0
    %123 = vdwg.mxu0
    %v124 = vmax.f32 %v121, 0.0
    %v125 = vld [vmem:[%s3] sm:$0xff]
    %v126 = vld [vmem:[%s3 + $0x8] sm:$0xff]
    %v127 = vld [vmem:[%s3 + $0x10] sm:$0xff]
    %v128 = vld [vmem:[%s3 + $0x18] sm:$0xff]
    %v129 = vld [vmem:[%s4] sm:$0x1]
    %v131 = vlaneseq
    %v132 = vshrl.u32 %v131, 7
    %v133 = vsub.s32 0, %v132
    %v134 = vrot.slane %v129, %v133
    %vm136 = vcmask 261120
    %v138 = vsel %vm136, %v124, 0
    %140 = vmatprep.subr.mxu0 0.0
    %141 = vmatpush1.msra.mxu0 %v125
    %142 = vmatprep.subr.mxu0 0.0
    %143 = vmatpush1.msra.mxu0 %v126
    %144 = vmatprep.subr.mxu0 0.0
    %145 = vmatpush1.msra.mxu0 %v127
    %146 = vmatprep.subr.mxu0 0.0
    %147 = vmatpush1.msra.mxu0 %v128
    %148 = vmatprep.subr.mxu0 0.0
    %149 = vmatpush1.msra.mxu0 0.0
    %150 = vmatprep.subr.mxu0 0.0
    %151 = vmatpush1.msra.mxu0 0.0
    %152 = vmatprep.subr.mxu0 0.0
    %153 = vmatpush1.msra.mxu0 0.0
    %154 = vmatprep.subr.mxu0 0.0
    %155 = vmatpush1.msra.mxu0 0.0
    %156 = vmatprep.subr.mxu0 0.0
    %157 = vmatpush1.msra.mxu0 0.0
    %158 = vmatprep.subr.mxu0 0.0
    %159 = vmatpush1.msra.mxu0 0.0
    %160 = vmatprep.subr.mxu0 0.0
    %161 = vmatpush1.msra.mxu0 0.0
    %162 = vmatprep.subr.mxu0 0.0
    %163 = vmatpush1.msra.mxu0 0.0
    %164 = vmatprep.subr.mxu0 0.0
    %165 = vmatpush1.msra.mxu0 0.0
    %166 = vmatprep.subr.mxu0 0.0
    %167 = vmatpush1.msra.mxu0 0.0
    %168 = vmatprep.subr.mxu0 0.0
    %169 = vmatpush1.msra.mxu0 0.0
    %170 = vmatprep.subr.mxu0 0.0
    %171 = vmatpush1.msra.mxu0 0.0
    %172 = vmatprep.subr.mxu0 0.0
    %173 = vmatpush1.msra.mxu0 0.0
    %174 = vmatprep.subr.mxu0 0.0
    %175 = vmatpush1.msra.mxu0 0.0
    %176 = vmatprep.subr.mxu0 0.0
    %177 = vmatpush1.msra.mxu0 0.0
    %178 = vmatprep.subr.mxu0 0.0
    %179 = vmatpush1.msra.mxu0 0.0
    %180 = vmatprep.subr.mxu0 0.0
    %181 = vmatpush1.msra.mxu0 0.0
    %182 = vmatprep.subr.mxu0 0.0
    %183 = vmatpush1.msra.mxu0 0.0
    %184 = vmatprep.subr.mxu0 0.0
    %185 = vmatpush1.msra.mxu0 0.0
    %186 = vmatprep.subr.mxu0 0.0
    %187 = vmatpush1.msra.mxu0 0.0
    %188 = vmatprep.subr.mxu0 0.0
    %189 = vmatpush1.msra.mxu0 0.0
    %190 = vmatprep.subr.mxu0 0.0
    %191 = vmatpush1.msra.mxu0 0.0
    %192 = vmatprep.subr.mxu0 0.0
    %193 = vmatpush1.msra.mxu0 0.0
    %194 = vmatprep.subr.mxu0 0.0
    %195 = vmatpush1.msra.mxu0 0.0
    %196 = vmatprep.subr.mxu0 0.0
    %197 = vmatpush1.msra.mxu0 0.0
    %198 = vmatprep.subr.mxu0 0.0
    %199 = vmatpush1.msra.mxu0 0.0
    %200 = vmatprep.subr.mxu0 0.0
    %201 = vmatpush1.msra.mxu0 0.0
    %202 = vmatprep.subr.mxu0 0.0
    %203 = vmatpush1.msra.mxu0 0.0
    %204 = vmatprep.mubr.f32.mxu0 0.0
    %205 = vmatmul.mubr.f32.gmra.mrb[0].mxu0 %v138
    %v206 = vpop.f32.mrb[0].mxu0
    %v207 = vadd.f32 %v134, %v206
    %v208 = vpop.f32.mrb[0].mxu0
    %209 = vdwg.mxu0
    %v210 = vmax.f32 %v207, 0.0
    %v211 = vld [vmem:[%s5] sm:$0xff]
    %v212 = vld [vmem:[%s5 + $0x8] sm:$0xff]
    %v213 = vld [vmem:[%s5 + $0x10] sm:$0xff]
    %v214 = vld [vmem:[%s5 + $0x18] sm:$0xff]
    %v215 = vld [vmem:[%s6] sm:$0x1]
    %v217 = vlaneseq
    %v218 = vshrl.u32 %v217, 7
    %v219 = vsub.s32 0, %v218
    %v220 = vrot.slane %v215, %v219
    %v223 = vsel %vm136, %v210, 0
    %225 = vmatprep.subr.mxu0 0.0
    %226 = vmatpush1.msra.mxu0 %v211
    %227 = vmatprep.subr.mxu0 0.0
    %228 = vmatpush1.msra.mxu0 %v212
    %229 = vmatprep.subr.mxu0 0.0
    %230 = vmatpush1.msra.mxu0 %v213
    %231 = vmatprep.subr.mxu0 0.0
    %232 = vmatpush1.msra.mxu0 %v214
    %233 = vmatprep.subr.mxu0 0.0
    %234 = vmatpush1.msra.mxu0 0.0
    %235 = vmatprep.subr.mxu0 0.0
    %236 = vmatpush1.msra.mxu0 0.0
    %237 = vmatprep.subr.mxu0 0.0
    %238 = vmatpush1.msra.mxu0 0.0
    %239 = vmatprep.subr.mxu0 0.0
    %240 = vmatpush1.msra.mxu0 0.0
    %241 = vmatprep.subr.mxu0 0.0
    %242 = vmatpush1.msra.mxu0 0.0
    %243 = vmatprep.subr.mxu0 0.0
    %244 = vmatpush1.msra.mxu0 0.0
    %245 = vmatprep.subr.mxu0 0.0
    %246 = vmatpush1.msra.mxu0 0.0
    %247 = vmatprep.subr.mxu0 0.0
    %248 = vmatpush1.msra.mxu0 0.0
    %249 = vmatprep.subr.mxu0 0.0
    %250 = vmatpush1.msra.mxu0 0.0
    %251 = vmatprep.subr.mxu0 0.0
    %252 = vmatpush1.msra.mxu0 0.0
    %253 = vmatprep.subr.mxu0 0.0
    %254 = vmatpush1.msra.mxu0 0.0
    %255 = vmatprep.subr.mxu0 0.0
    %256 = vmatpush1.msra.mxu0 0.0
    %257 = vmatprep.subr.mxu0 0.0
    %258 = vmatpush1.msra.mxu0 0.0
    %259 = vmatprep.subr.mxu0 0.0
    %260 = vmatpush1.msra.mxu0 0.0
    %261 = vmatprep.subr.mxu0 0.0
    %262 = vmatpush1.msra.mxu0 0.0
    %263 = vmatprep.subr.mxu0 0.0
    %264 = vmatpush1.msra.mxu0 0.0
    %265 = vmatprep.subr.mxu0 0.0
    %266 = vmatpush1.msra.mxu0 0.0
    %267 = vmatprep.subr.mxu0 0.0
    %268 = vmatpush1.msra.mxu0 0.0
    %269 = vmatprep.subr.mxu0 0.0
    %270 = vmatpush1.msra.mxu0 0.0
    %271 = vmatprep.subr.mxu0 0.0
    %272 = vmatpush1.msra.mxu0 0.0
    %273 = vmatprep.subr.mxu0 0.0
    %274 = vmatpush1.msra.mxu0 0.0
    %275 = vmatprep.subr.mxu0 0.0
    %276 = vmatpush1.msra.mxu0 0.0
    %277 = vmatprep.subr.mxu0 0.0
    %278 = vmatpush1.msra.mxu0 0.0
    %279 = vmatprep.subr.mxu0 0.0
    %280 = vmatpush1.msra.mxu0 0.0
    %281 = vmatprep.subr.mxu0 0.0
    %282 = vmatpush1.msra.mxu0 0.0
    %283 = vmatprep.subr.mxu0 0.0
    %284 = vmatpush1.msra.mxu0 0.0
    %285 = vmatprep.subr.mxu0 0.0
    %286 = vmatpush1.msra.mxu0 0.0
    %287 = vmatprep.subr.mxu0 0.0
    %288 = vmatpush1.msra.mxu0 0.0
    %289 = vmatprep.mubr.f32.mxu0 0.0
    %290 = vmatmul.mubr.f32.gmra.mrb[0].mxu0 %v223
    %v291 = vpop.f32.mrb[0].mxu0
    %v292 = vadd.f32 %v220, %v291
    %v293 = vpop.f32.mrb[0].mxu0
    %294 = vdwg.mxu0
    %vm295 = vcmask 31744
    %296 = vst.msk [vmem:[%s7] sm:$0xff] %vm295, %v292
    // Predicated region
    $region34: #{tpu_custom_call.1} parent=1 // pred_check
      _
    $region35: #{tpu_custom_call.1} parent=1 // pred_check_branch
      %298 = sbr.rel (0) target = $region37
    $region36: #{tpu_custom_call.1} parent=1 // pred_region
      _
    $region37: #{tpu_custom_call.1} parent=1 // pred_fallthru
      _
    // Predicated region
    $region38: #{tpu_custom_call.1} parent=1 // pred_check
      _
    $region39: #{tpu_custom_call.1} parent=1 // pred_check_branch
      %300 = sbr.rel (0) target = $region41
    $region40: #{tpu_custom_call.1} parent=1 // pred_region
      _
    $region41: #{tpu_custom_call.1} parent=1 // pred_fallthru
      _
    %301 = vsyncpa [#allocation3], 1

</llo_original>
